<compile_context>
chip_gen: v7x
topology: tpu7x:2x2x1
jax: 0.10.0
libtpu: 0.0.40
codegen_flags: <defaults>
</compile_context>

<pallas_src>
import jax
import jax.numpy as jnp
from jax.experimental import pallas as pl
from jax.experimental.pallas import tpu as pltpu

NEG_SLOPE = 0.01                      # nn.LeakyReLU default


def _leaky(x):
    return jnp.where(x >= 0, x, NEG_SLOPE * x)


def _vmem_limit_bytes():
    # Working set of these kernels is < 1 MiB at the test shapes; the limit
    # only needs to comfortably exceed it.  Query physical VMEM when possible
    # (128 MiB v5e/v6e, 64 MiB v7x) per review, with a safe fallback.
    try:
        cap = int(pltpu.get_tpu_info().vmem_capacity_bytes)
    except Exception:
        cap = 64 * 1024 * 1024
    return min(cap * 3 // 4, 96 * 1024 * 1024)


def _const_map(ndim):
    def index_map(b):
        return (0,) * ndim
    return index_map


# ----------------------------------------------------------------------------
# Kernel 1: unflatten (ConvTranspose2d on a 1x1 input == matmul) + LeakyReLU
# ----------------------------------------------------------------------------
def _dense_kernel(x_ref, w_ref, b_ref, o_ref):
    # x: (M, K) bf16, w: (K, N) bf16, b: (1, N) f32 -> o: (M, N) f32
    acc = jnp.dot(x_ref[...], w_ref[...], preferred_element_type=jnp.float32)
    o_ref[...] = _leaky(acc + b_ref[...]).astype(o_ref.dtype)


def dense_leaky(x, w, b):
    """(M,K) @ (K,N) + b -> LeakyReLU.  bf16 MXU operands, f32 accum/output."""
    M, K = x.shape
    N = w.shape[1]
    return pl.pallas_call(
        _dense_kernel,
        out_shape=jax.ShapeDtypeStruct((M, N), jnp.float32),
        grid=(1,),
        in_specs=[
            pl.BlockSpec((M, K), _const_map(2)),
            pl.BlockSpec((K, N), _const_map(2)),
            pl.BlockSpec((1, N), _const_map(2)),
        ],
        out_specs=pl.BlockSpec((M, N), _const_map(2)),
        compiler_params=pltpu.CompilerParams(
            dimension_semantics=("arbitrary",),
            vmem_limit_bytes=_vmem_limit_bytes()),
    )(x.astype(jnp.bfloat16), w.astype(jnp.bfloat16),
      b.reshape(1, N).astype(jnp.float32))


# ----------------------------------------------------------------------------
# Kernel 2: whole conv stack fused (top conv -> layer stack -> 1x1 to_rgb)
# ----------------------------------------------------------------------------
def _make_decoder_stack_kernel(conv_specs):
    """conv_specs: list of (H, W, Cin, Cout, upsample) per 3x3 conv, with
    H, W the OUTPUT (post-upsample) spatial dims of that conv."""
    n_conv = len(conv_specs)

    def conv3x3(x, w_ref, b_ref, pad_ref, H, W, cin, cout, upsample):
        # x: (h_in, w_in, cin) f32 value; w_ref: (9, cin, cout) bf16;
        # b_ref: (1, cout) f32; pad_ref: (H+2, W+2, cin) f32 VMEM scratch.
        if upsample:
            hin, win = x.shape[0], x.shape[1]
            # nearest-2x on the small pre-upsample tile (never touches HBM)
            x = jnp.broadcast_to(x[:, :, None, :], (hin, win, 2, cin))
            x = x.reshape(hin, 2 * win, cin)
            x = jnp.broadcast_to(x[:, None, :, :], (hin, 2, 2 * win, cin))
            x = x.reshape(2 * hin, 2 * win, cin)

        # SAME zero padding into a VMEM scratch.
        # TODO(synk): bf16 scratch + border-only zeroing + pltpu.roll-based
        #   dx shifts (negligible at 16x16, matters at real resolutions).
        pad_ref[...] = jnp.zeros_like(pad_ref)
        pad_ref[1:H + 1, 1:W + 1, :] = x

        # 3x3 tap loop: 9 accumulated (H*W, Cin) @ (Cin, Cout) dots into one
        # f32 accumulator (replaces the im2col concat of the previous version).
        acc = None
        t = 0
        for dy in range(3):
            for dx in range(3):
                slab = pad_ref[dy:dy + H, dx:dx + W, :]
                slab = slab.reshape(H * W, cin).astype(jnp.bfloat16)
                d = jnp.dot(slab, w_ref[t], preferred_element_type=jnp.float32)
                acc = d if acc is None else acc + d
                t += 1

        acc = _leaky(acc + b_ref[...])          # f32 bias + activation
        return acc.reshape(H, W, cout)          # f32, stays in VMEM/vregs

    def kernel(*refs):
        x_ref = refs[0]
        w_refs = refs[1:1 + n_conv]
        b_refs = refs[1 + n_conv:1 + 2 * n_conv]
        rgb_w_ref = refs[1 + 2 * n_conv]
        rgb_b_ref = refs[2 + 2 * n_conv]
        o_ref = refs[3 + 2 * n_conv]
        pad_refs = refs[4 + 2 * n_conv:]

        h = x_ref[0].astype(jnp.float32)        # (K0, K0, top_ch)
        for i, (H, W, cin, cout, ups) in enumerate(conv_specs):
            h = conv3x3(h, w_refs[i], b_refs[i], pad_refs[i],
                        H, W, cin, cout, ups)

        # fused 1x1 to_rgb epilogue (no activation, per the PyTorch module)
        Hf, Wf, cf = conv_specs[-1][0], conv_specs[-1][1], conv_specs[-1][3]
        feat = h.reshape(Hf * Wf, cf).astype(jnp.bfloat16)
        rgb = jnp.dot(feat, rgb_w_ref[...],
                      preferred_element_type=jnp.float32) + rgb_b_ref[...]
        # TODO(synk): compute this 3-wide projection on the VPU and emit a
        #   lane-dense / NCHW block directly to absorb the host transpose.
        o_ref[...] = rgb.reshape(1, Hf, Wf, 3).astype(o_ref.dtype)

    return kernel


def decoder_conv_stack(h0, params):
    """Fused: top 3x3 conv -> ProGANDecoderLayer stack -> 1x1 to_rgb.

    h0: (B, K0, K0, top_ch) f32 NHWC (output of the unflatten block).
    Returns (B, Hout, Wout, 3) f32 NHWC.
    """
    B, K0, _, top_ch = h0.shape

    # ordered conv list: (weight HWIO, bias, upsample-before?)
    conv_list = [(params["top_same_w"], params["top_same_b"], False)]
    for (sw, sb, cw, cb) in params["layers"]:
        conv_list.append((sw, sb, True))       # upsample x2 + shrink conv
        conv_list.append((cw, cb, False))      # same conv

    conv_specs, w_args, b_args, pad_shapes = [], [], [], []
    cur_h, cur_w, cur_c = K0, K0, top_ch
    for (w3, b3, ups) in conv_list:
        cin, cout = int(w3.shape[2]), int(w3.shape[3])
        assert cin == cur_c
        if ups:
            cur_h, cur_w = 2 * cur_h, 2 * cur_w
        conv_specs.append((cur_h, cur_w, cin, cout, ups))
        w_args.append(w3.reshape(9, cin, cout).astype(jnp.bfloat16))
        b_args.append(b3.reshape(1, cout).astype(jnp.float32))
        pad_shapes.append((cur_h + 2, cur_w + 2, cin))
        cur_c = cout
    Hout, Wout, c_last = cur_h, cur_w, cur_c

    rgb_w = params["rgb_w"].astype(jnp.bfloat16)            # (c_last, 3)
    rgb_b = params["rgb_b"].reshape(1, 3).astype(jnp.float32)

    in_specs = [pl.BlockSpec((1, K0, K0, top_ch), lambda b: (b, 0, 0, 0))]
    args = [h0.astype(jnp.float32)]
    for wa in w_args:
        in_specs.append(pl.BlockSpec(wa.shape, _const_map(3)))
        args.append(wa)
    for ba in b_args:
        in_specs.append(pl.BlockSpec(ba.shape, _const_map(2)))
        args.append(ba)
    in_specs.append(pl.BlockSpec(rgb_w.shape, _const_map(2)))
    args.append(rgb_w)
    in_specs.append(pl.BlockSpec(rgb_b.shape, _const_map(2)))
    args.append(rgb_b)

    kernel = _make_decoder_stack_kernel(conv_specs)
    return pl.pallas_call(
        kernel,
        out_shape=jax.ShapeDtypeStruct((B, Hout, Wout, 3), jnp.float32),
        grid=(B,),
        in_specs=in_specs,
        out_specs=pl.BlockSpec((1, Hout, Wout, 3), lambda b: (b, 0, 0, 0)),
        scratch_shapes=[pltpu.VMEM(s, jnp.float32) for s in pad_shapes],
        compiler_params=pltpu.CompilerParams(
            # per-batch images are independent; per-step DMA (latent + tiny
            # RGB block) is negligible vs. the fused in-VMEM compute, so the
            # B=2 / 2-TC pipeline-depth concern does not apply here.
            dimension_semantics=("parallel",),
            vmem_limit_bytes=_vmem_limit_bytes()),
    )(*args)


# ----------------------------------------------------------------------------
# Parameter construction (deterministic, synthetic)
# ----------------------------------------------------------------------------
def build_params(key, latent_size, input_power, output_power,
                 end_filters=16, max_filters=512):
    assert output_power > input_power
    num_layers = output_power - input_power

    # channel schedule (mirrors ProGANDecoder.__init__)
    out_channels = end_filters
    reverse_specs = []
    for _ in range(num_layers):
        in_channels = min(out_channels * 2, max_filters)
        reverse_specs.append((in_channels, out_channels))
        out_channels = in_channels
    ordered_specs = list(reversed(reverse_specs))
    top_channels = out_channels
    K0 = 2 ** input_power

    def nxt(k):
        k, sub = jax.random.split(k)
        return k, sub

    def normal(k, shape, fan_in):
        return jax.random.normal(k, shape, jnp.float32) / jnp.sqrt(float(fan_in))

    params = {}
    key, k = nxt(key)
    # ConvTranspose2d(latent, top_channels, kernel=K0) on a 1x1 input is a
    # matmul; store weight as (latent, K0, K0, top_channels).
    params["unflatten_w"] = normal(k, (latent_size, K0, K0, top_channels),
                                   latent_size)
    key, k = nxt(key)
    params["unflatten_b"] = 0.1 * jax.random.normal(k, (top_channels,), jnp.float32)

    key, k = nxt(key)
    params["top_same_w"] = normal(k, (3, 3, top_channels, top_channels),
                                  9 * top_channels)
    key, k = nxt(key)
    params["top_same_b"] = 0.1 * jax.random.normal(k, (top_channels,), jnp.float32)

    layers = []
    for (cin, cout) in ordered_specs:
        key, k = nxt(key)
        sw = normal(k, (3, 3, cin, cout), 9 * cin)
        key, k = nxt(key)
        sb = 0.1 * jax.random.normal(k, (cout,), jnp.float32)
        key, k = nxt(key)
        cw = normal(k, (3, 3, cout, cout), 9 * cout)
        key, k = nxt(key)
        cb = 0.1 * jax.random.normal(k, (cout,), jnp.float32)
        layers.append((sw, sb, cw, cb))
    params["layers"] = layers

    key, k = nxt(key)
    params["rgb_w"] = normal(k, (end_filters, 3), end_filters)   # 1x1 conv
    key, k = nxt(key)
    params["rgb_b"] = 0.1 * jax.random.normal(k, (3,), jnp.float32)

    params["meta"] = dict(K0=K0, top_channels=top_channels, latent=latent_size)
    return params


# ----------------------------------------------------------------------------
# Forward pass (Pallas kernels for compute, thin JAX glue for layout)
# ----------------------------------------------------------------------------
def progan_decoder_forward(params, x_latent):
    meta = params["meta"]
    K0, top_ch, L = meta["K0"], meta["top_channels"], meta["latent"]
    B = x_latent.shape[0]

    # top_block part 1: ConvTranspose2d(latent -> top_ch, kernel=K0) on a 1x1
    # map == one matmul; bias is per output channel, tiled over K0*K0 pixels
    # (pixel-major / channel-minor flattening matches the NHWC reshape below).
    w_flat = params["unflatten_w"].reshape(L, K0 * K0 * top_ch)
    b_full = jnp.tile(params["unflatten_b"], K0 * K0)
    h = dense_leaky(x_latent, w_flat, b_full)              # (B, K0*K0*top_ch) f32
    h = h.reshape(B, K0, K0, top_ch)                       # NHWC f32

    o_nhwc = decoder_conv_stack(h, params)                 # (B, H, W, 3) f32
    # TODO(synk): emit NCHW directly from the kernel out_spec to absorb this
    #   (tiny at 16x16; relevant at real resolutions).
    return jnp.transpose(o_nhwc, (0, 3, 1, 2))             # (B, 3, H, W)


# ----------------------------------------------------------------------------
# Pure-JAX reference with the same precision policy (bf16 MXU inputs,
# f32 accumulation, f32 activations)
# ----------------------------------------------------------------------------
def _ref_conv3x3(x_f32, w, b):
    y = jax.lax.conv_general_dilated(
        x_f32.astype(jnp.bfloat16), w.astype(jnp.bfloat16), (1, 1), "SAME",
        dimension_numbers=("NHWC", "HWIO", "NHWC"),
        preferred_element_type=jnp.float32)
    return _leaky(y + b)                                   # f32


def ref_forward(params, x_latent):
    meta = params["meta"]
    K0, top_ch, L = meta["K0"], meta["top_channels"], meta["latent"]
    B = x_latent.shape[0]
    bf = jnp.bfloat16

    w_flat = params["unflatten_w"].reshape(L, K0 * K0 * top_ch)
    b_full = jnp.tile(params["unflatten_b"], K0 * K0)
    h = _leaky(jnp.dot(x_latent.astype(bf), w_flat.astype(bf),
                       preferred_element_type=jnp.float32) + b_full)
    h = h.reshape(B, K0, K0, top_ch)                       # f32 NHWC
    h = _ref_conv3x3(h, params["top_same_w"], params["top_same_b"])
    for (sw, sb, cw, cb) in params["layers"]:
        h = jnp.repeat(jnp.repeat(h, 2, axis=1), 2, axis=2)    # nearest x2
        h = _ref_conv3x3(h, sw, sb)
        h = _ref_conv3x3(h, cw, cb)
    Bh, Hh, Wh, C = h.shape
    o = jnp.dot(h.reshape(Bh * Hh * Wh, C).astype(bf),
                params["rgb_w"].astype(bf),
                preferred_element_type=jnp.float32) + params["rgb_b"]
    o = o.reshape(Bh, Hh, Wh, 3)
    return jnp.transpose(o, (0, 3, 1, 2))


# ----------------------------------------------------------------------------
if __name__ == "__main__":
    # Small configuration: latent 32, 4x4 -> 16x16 output, end_filters=8.
    LATENT = 32
    INPUT_POWER = 2
    OUTPUT_POWER = 4
    END_FILTERS = 8
    BATCH = 2

    key = jax.random.PRNGKey(0)
    pkey, xkey = jax.random.split(key)
    params = build_params(pkey, LATENT, INPUT_POWER, OUTPUT_POWER,
                          end_filters=END_FILTERS, max_filters=512)
    x = jax.random.normal(xkey, (BATCH, LATENT), jnp.float32)

    out = jax.block_until_ready(progan_decoder_forward(params, x))

    expected_shape = (BATCH, 3, 2 ** OUTPUT_POWER, 2 ** OUTPUT_POWER)
    assert out.shape == expected_shape, (out.shape, expected_shape)
    assert out.dtype == jnp.float32

    ref = jax.block_until_ready(ref_forward(params, x))
    max_err = float(jnp.max(jnp.abs(out - ref)))
    # Tolerance sized for the bf16-MXU precision policy: per-conv bf16 input
    # rounding differences vs. the independent XLA conv reference compound to
    # ~2e-3 over this depth (measured on the previous run), so 1e-2 gives
    # ~5x margin without masking real indexing/ordering bugs.
    assert jnp.allclose(out, ref, rtol=1e-2, atol=1e-2), max_err

    print("KERNEL_OK")
</pallas_src>

<mosaic_0001>
module attributes {stable_mosaic.version = 11 : i64} {
  func.func @_dense_kernel(%arg0: i32, %arg1: memref<2x32xbf16, #tpu.memory_space<vmem>>, %arg2: memref<32x512xbf16, #tpu.memory_space<vmem>>, %arg3: memref<1x512xf32, #tpu.memory_space<vmem>>, %arg4: memref<2x512xf32, #tpu.memory_space<vmem>>) attributes {dimension_semantics = [#tpu.dimension_semantics<arbitrary>], iteration_bounds = array<i64: 1>, scalar_prefetch = 0 : i64, scratch_operands = 0 : i64, tpu.core_type = #tpu.core_type<tc>, window_params = [{pipeline_mode = #tpu.pipeline_mode<synchronous>, transform_indices = @transform_0, window_bounds = array<i64: 2, 32>}, {pipeline_mode = #tpu.pipeline_mode<synchronous>, transform_indices = @transform_1, window_bounds = array<i64: 32, 512>}, {pipeline_mode = #tpu.pipeline_mode<synchronous>, transform_indices = @transform_2, window_bounds = array<i64: 1, 512>}, {pipeline_mode = #tpu.pipeline_mode<synchronous>, transform_indices = @transform_3, window_bounds = array<i64: 2, 512>}]} {
    %c0 = arith.constant 0 : index
    %c0_0 = arith.constant 0 : index
    %0 = vector.load %arg1[%c0, %c0_0] : memref<2x32xbf16, #tpu.memory_space<vmem>>, vector<2x32xbf16>
    %c0_1 = arith.constant 0 : index
    %c0_2 = arith.constant 0 : index
    %1 = vector.load %arg2[%c0_1, %c0_2] : memref<32x512xbf16, #tpu.memory_space<vmem>>, vector<32x512xbf16>
    %cst = arith.constant dense<0.000000e+00> : vector<2x512xf32>
    %2 = tpu.matmul %0, %1, %cst {dimension_numbers = #tpu.dot_dimension_numbers<[1], [0], [0], [1], [0, 0, 1, 1], [], []>} : vector<2x32xbf16>, vector<32x512xbf16>, vector<2x512xf32> -> vector<2x512xf32>
    %c0_3 = arith.constant 0 : index
    %c0_4 = arith.constant 0 : index
    %3 = vector.load %arg3[%c0_3, %c0_4] : memref<1x512xf32, #tpu.memory_space<vmem>>, vector<1x512xf32>
    %4 = vector.broadcast %3 : vector<1x512xf32> to vector<2x512xf32>
    %5 = arith.addf %2, %4 : vector<2x512xf32>
    %cst_5 = arith.constant 0.000000e+00 : f32
    %6 = vector.broadcast %cst_5 : f32 to vector<2x512xf32>
    %7 = arith.cmpf oge, %5, %6 : vector<2x512xf32>
    %cst_6 = arith.constant 0.00999999977 : f32
    %8 = vector.broadcast %cst_6 : f32 to vector<2x512xf32>
    %9 = arith.mulf %8, %5 : vector<2x512xf32>
    %10 = arith.select %7, %5, %9 : vector<2x512xi1>, vector<2x512xf32>
    %c0_7 = arith.constant 0 : index
    %c0_8 = arith.constant 0 : index
    %11 = vector.load %arg4[%c0_7, %c0_8] : memref<2x512xf32, #tpu.memory_space<vmem>>, vector<2x512xf32>
    tpu.vector_store %arg4[%c0_7, %c0_8], %10 {strides = array<i32>} : memref<2x512xf32, #tpu.memory_space<vmem>>, vector<2x512xf32>,
    return
  }
  func.func @transform_0(%arg0: i32) -> (i32, i32) {
    %c0_i32 = arith.constant 0 : i32
    %c0_i32_0 = arith.constant 0 : i32
    %c0_i32_1 = arith.constant 0 : i32
    return %c0_i32, %c0_i32_0 : i32, i32
  }
  func.func @transform_1(%arg0: i32) -> (i32, i32) {
    %c0_i32 = arith.constant 0 : i32
    %c0_i32_0 = arith.constant 0 : i32
    %c0_i32_1 = arith.constant 0 : i32
    return %c0_i32, %c0_i32_0 : i32, i32
  }
  func.func @transform_2(%arg0: i32) -> (i32, i32) {
    %c0_i32 = arith.constant 0 : i32
    %c0_i32_0 = arith.constant 0 : i32
    %c0_i32_1 = arith.constant 0 : i32
    return %c0_i32, %c0_i32_0 : i32, i32
  }
  func.func @transform_3(%arg0: i32) -> (i32, i32) {
    %c0_i32 = arith.constant 0 : i32
    %c0_i32_0 = arith.constant 0 : i32
    %c0_i32_1 = arith.constant 0 : i32
    return %c0_i32, %c0_i32_0 : i32, i32
  }
}

</mosaic_0001>

<llo_original>
// kernel: tpu_custom_call.1
$region0: #{tpu_custom_call.1}
  #allocation0 [shape = 'u32[]', space=smem, size = 0x4, offset = 0x4, fixed_abs, tag = 'smem constant byte address 0x4 - core index']
  #allocation1 [shape = 'u32[144,128]{1,0:T(1,128)}', space=vmem, size = 0x12000, scoped, tag = 'internal scratch']
  %s0 = inlined_call_operand.hbm [shape: bf16[2,32], index: 0, kind: input, shape index: {}]
  %s1 = inlined_call_operand.hbm [shape: bf16[32,512], index: 1, kind: input, shape index: {}]
  %s2 = inlined_call_operand.vmem [shape: f32[1,512], index: 2, kind: input, shape index: {}]
  %s3 = inlined_call_operand.hbm [shape: f32[2,512], index: 3, kind: output, shape index: {}]
  %s4 = sld [smem:[#allocation0]]
  $region30: #{tpu_custom_call.1} parent=0
    _
  %s6 = ssub.s32 1, %s4
  %s7 = scalar_select 0, %s6, %s4
  $region1: #{tpu_custom_call.1} parent=0
    #allocation2 [shape = 'u8[512]{0}', space=vmem, size = 0x400, scoped, tag = 'input window, operand 0, single buffered']
    #allocation3 [shape = 's32[1]{0}', space=sflag, size = 0x4, scoped, tag = 'scoped memory for tpu_custom_call.1']
    #allocation4 [shape = 's32[1]{0}', space=sflag, size = 0x4, scoped, tag = 'scoped memory for tpu_custom_call.1']
    #allocation5 [shape = 'u8[32768]{0}', space=vmem, size = 0x8000, scoped, tag = 'input window, operand 1, single buffered']
    #allocation6 [shape = 's32[1]{0}', space=sflag, size = 0x4, scoped, tag = 'scoped memory for tpu_custom_call.1']
    #allocation7 [shape = 'u8[4096]{0}', space=vmem, size = 0x1000, scoped, tag = 'output window, operand 0, single buffered']
    %8 = vsyncpa [#allocation3], 0
    %9 = vsyncpa [#allocation6], 0
    %10 = vsyncpa [#allocation4], 0
    // Predicated region
    $region2: #{tpu_custom_call.1} parent=1 // pred_check
      _
    $region3: #{tpu_custom_call.1} parent=1 // pred_check_branch
      %12 = sbr.rel (0) target = $region5
    $region4: #{tpu_custom_call.1} parent=1 // pred_region
      %s14 = ssub.s32 16, 16
      %15 = vsyncadd [#allocation3], %s14
      %s17 = sshll.u32 [#allocation2], 4
      %s18 = int_to_ptr.vmem [resolvable:$true] %s17
      %20 = dma.hbm_to_vmem [thread:$0]  %s0, 16, %s18, [#allocation3]
    $region5: #{tpu_custom_call.1} parent=1 // pred_fallthru
      _
    // Predicated region
    $region6: #{tpu_custom_call.1} parent=1 // pred_check
      _
    $region7: #{tpu_custom_call.1} parent=1 // pred_check_branch
      %22 = sbr.rel (0) target = $region9
    $region8: #{tpu_custom_call.1} parent=1 // pred_region
      %s24 = ssub.s32 1024, 1024
      %25 = vsyncadd [#allocation6], %s24
      %s26 = sshll.u32 [#allocation5], 4
      %s27 = int_to_ptr.vmem [resolvable:$true] %s26
      %32 = dma.hbm_to_vmem [thread:$0]  %s1, 1024, %s27, [#allocation6], 256, 256, 16
    $region9: #{tpu_custom_call.1} parent=1 // pred_fallthru
      _
    // Predicated region
    $region10: #{tpu_custom_call.1} parent=1 // pred_check
      _
    $region11: #{tpu_custom_call.1} parent=1 // pred_check_branch
      %34 = sbr.rel (0) target = $region13
    $region12: #{tpu_custom_call.1} parent=1 // pred_region
      _
    $region13: #{tpu_custom_call.1} parent=1 // pred_fallthru
      _
    // Predicated region
    $region14: #{tpu_custom_call.1} parent=1 // pred_check
      _
    $region15: #{tpu_custom_call.1} parent=1 // pred_check_branch
      %36 = sbr.rel (0) target = $region17
    $region16: #{tpu_custom_call.1} parent=1 // pred_region
      %37 = dma.done [#allocation3], 16
    $region17: #{tpu_custom_call.1} parent=1 // pred_fallthru
      _
    // Predicated region
    $region18: #{tpu_custom_call.1} parent=1 // pred_check
      _
    $region19: #{tpu_custom_call.1} parent=1 // pred_check_branch
      %39 = sbr.rel (0) target = $region21
    $region20: #{tpu_custom_call.1} parent=1 // pred_region
      %40 = dma.done [#allocation6], 1024
    $region21: #{tpu_custom_call.1} parent=1 // pred_fallthru
      _
    %v42 = vld [vmem:[#allocation2] sm:$0x1]
    %v43 = vld [vmem:[#allocation5] sm:$0xff]
    %v44 = vld [vmem:[#allocation5 + $0x8] sm:$0xff]
    %v45 = vld [vmem:[#allocation5 + $0x10] sm:$0xff]
    %v46 = vld [vmem:[#allocation5 + $0x18] sm:$0xff]
    %v47 = vld [vmem:[#allocation5 + $0x20] sm:$0xff]
    %v48 = vld [vmem:[#allocation5 + $0x28] sm:$0xff]
    %v49 = vld [vmem:[#allocation5 + $0x30] sm:$0xff]
    %v50 = vld [vmem:[#allocation5 + $0x38] sm:$0xff]
    %v51 = vld [vmem:[%s2] sm:$0xf]
    %v53 = vlaneseq
    %v54 = vshrl.u32 %v53, 7
    %v55 = vsub.s32 0, %v54
    %v56 = vrot.slane %v51, %v55
    %v57 = vlaneseq
    %v58 = vshrl.u32 %v57, 7
    %v59 = vsub.s32 1, %v58
    %v60 = vrot.slane %v51, %v59
    %v61 = vlaneseq
    %v62 = vshrl.u32 %v61, 7
    %v63 = vsub.s32 2, %v62
    %v64 = vrot.slane %v51, %v63
    %v65 = vlaneseq
    %v66 = vshrl.u32 %v65, 7
    %v67 = vsub.s32 3, %v66
    %v68 = vrot.slane %v51, %v67
    %v81 = vunpack.c.l.b16 %v43
    %v82 = vunpack.c.h.b16 %v43
    %v83 = vunpack.c.l.b16 %v44
    %v84 = vunpack.c.h.b16 %v44
    %v85 = vunpack.c.l.b16 %v45
    %v86 = vunpack.c.h.b16 %v45
    %v87 = vunpack.c.l.b16 %v46
    %v88 = vunpack.c.h.b16 %v46
    %v89 = vunpack.c.l.b16 %v47
    %v90 = vunpack.c.h.b16 %v47
    %v91 = vunpack.c.l.b16 %v48
    %v92 = vunpack.c.h.b16 %v48
    %v93 = vunpack.c.l.b16 %v49
    %v94 = vunpack.c.h.b16 %v49
    %v95 = vunpack.c.l.b16 %v50
    %v96 = vunpack.c.h.b16 %v50
    %v97 = vpack.c.b16 %v85, %v81
    %v98 = vpack.c.b16 %v86, %v82
    %v99 = vpack.c.b16 %v87, %v83
    %v100 = vpack.c.b16 %v88, %v84
    %v101 = vpack.c.b16 %v93, %v89
    %v102 = vpack.c.b16 %v94, %v90
    %v103 = vpack.c.b16 %v95, %v91
    %v104 = vpack.c.b16 %v96, %v92
    %vm113 = vcmask 261120
    %v115 = vsel %vm113, %v42, 0
    %117 = vmatprep.subr.bf16.mxu0 %v98
    %118 = vmatpush1.bf16.msra.mxu0 %v97
    %119 = vmatprep.subr.bf16.mxu0 %v102
    %120 = vmatpush1.bf16.msra.mxu0 %v101
    %121 = vmatprep.subr.bf16.mxu0 0
    %122 = vmatpush1.bf16.msra.mxu0 0
    %123 = vmatprep.subr.bf16.mxu0 0
    %124 = vmatpush1.bf16.msra.mxu0 0
    %125 = vmatprep.subr.bf16.mxu0 0
    %126 = vmatpush1.bf16.msra.mxu0 0
    %127 = vmatprep.subr.bf16.mxu0 0
    %128 = vmatpush1.bf16.msra.mxu0 0
    %129 = vmatprep.subr.bf16.mxu0 0
    %130 = vmatpush1.bf16.msra.mxu0 0
    %131 = vmatprep.subr.bf16.mxu0 0
    %132 = vmatpush1.bf16.msra.mxu0 0
    %133 = vmatprep.subr.bf16.mxu0 0
    %134 = vmatpush1.bf16.msra.mxu0 0
    %135 = vmatprep.subr.bf16.mxu0 0
    %136 = vmatpush1.bf16.msra.mxu0 0
    %137 = vmatprep.subr.bf16.mxu0 0
    %138 = vmatpush1.bf16.msra.mxu0 0
    %139 = vmatprep.subr.bf16.mxu0 0
    %140 = vmatpush1.bf16.msra.mxu0 0
    %141 = vmatprep.subr.bf16.mxu0 0
    %142 = vmatpush1.bf16.msra.mxu0 0
    %143 = vmatprep.subr.bf16.mxu0 0
    %144 = vmatpush1.bf16.msra.mxu0 0
    %145 = vmatprep.subr.bf16.mxu0 0
    %146 = vmatpush1.bf16.msra.mxu0 0
    %147 = vmatprep.subr.bf16.mxu0 0
    %148 = vmatpush1.bf16.msra.mxu0 0
    %149 = vmatprep.mubr.bf16.mxu0 0
    %150 = vmatmul.mubr.bf16.gmra.mrb[0].mxu0 %v115
    %v151 = vpop.f32.mrb[0].mxu0
    %v152 = vadd.f32 %v56, %v151
    %v153 = vpop.f32.mrb[0].mxu0
    %v154 = vadd.f32 %v60, %v153
    %v155 = vpop.f32.mrb[0].mxu0
    %v156 = vpop.f32.mrb[0].mxu0
    %157 = vdwg.mxu0
    %158 = vmatprep.subr.bf16.mxu0 %v100
    %159 = vmatpush1.bf16.msra.mxu0 %v99
    %160 = vmatprep.subr.bf16.mxu0 %v104
    %161 = vmatpush1.bf16.msra.mxu0 %v103
    %162 = vmatprep.subr.bf16.mxu0 0
    %163 = vmatpush1.bf16.msra.mxu0 0
    %164 = vmatprep.subr.bf16.mxu0 0
    %165 = vmatpush1.bf16.msra.mxu0 0
    %166 = vmatprep.subr.bf16.mxu0 0
    %167 = vmatpush1.bf16.msra.mxu0 0
    %168 = vmatprep.subr.bf16.mxu0 0
    %169 = vmatpush1.bf16.msra.mxu0 0
    %170 = vmatprep.subr.bf16.mxu0 0
    %171 = vmatpush1.bf16.msra.mxu0 0
    %172 = vmatprep.subr.bf16.mxu0 0
    %173 = vmatpush1.bf16.msra.mxu0 0
    %174 = vmatprep.subr.bf16.mxu0 0
    %175 = vmatpush1.bf16.msra.mxu0 0
    %176 = vmatprep.subr.bf16.mxu0 0
    %177 = vmatpush1.bf16.msra.mxu0 0
    %178 = vmatprep.subr.bf16.mxu0 0
    %179 = vmatpush1.bf16.msra.mxu0 0
    %180 = vmatprep.subr.bf16.mxu0 0
    %181 = vmatpush1.bf16.msra.mxu0 0
    %182 = vmatprep.subr.bf16.mxu0 0
    %183 = vmatpush1.bf16.msra.mxu0 0
    %184 = vmatprep.subr.bf16.mxu0 0
    %185 = vmatpush1.bf16.msra.mxu0 0
    %186 = vmatprep.subr.bf16.mxu0 0
    %187 = vmatpush1.bf16.msra.mxu0 0
    %188 = vmatprep.subr.bf16.mxu0 0
    %189 = vmatpush1.bf16.msra.mxu0 0
    %190 = vmatprep.mubr.bf16.mxu0 0
    %191 = vmatmul.mubr.bf16.gmra.mrb[0].mxu0 %v115
    %v192 = vpop.f32.mrb[0].mxu0
    %v193 = vadd.f32 %v64, %v192
    %v194 = vpop.f32.mrb[0].mxu0
    %v195 = vadd.f32 %v68, %v194
    %v196 = vpop.f32.mrb[0].mxu0
    %v197 = vpop.f32.mrb[0].mxu0
    %198 = vdwg.mxu0
    %vm199 = vcmp.ge.f32.partialorder %v152, 0.0
    %vm200 = vcmp.ge.f32.partialorder %v154, 0.0
    %vm201 = vcmp.ge.f32.partialorder %v193, 0.0
    %vm202 = vcmp.ge.f32.partialorder %v195, 0.0
    %v203 = vmul.f32 %v152, 0.01
    %v204 = vmul.f32 %v154, 0.01
    %v205 = vmul.f32 %v193, 0.01
    %v206 = vmul.f32 %v195, 0.01
    %v207 = vsel %vm199, %v152, %v203
    %v208 = vsel %vm200, %v154, %v204
    %v209 = vsel %vm201, %v193, %v205
    %v210 = vsel %vm202, %v195, %v206
    %v215 = vcombine.low %v207, %v208
    %v216 = vcombine.low %v209, %v210
    %v218 = vunpack.c.l.s4 1983009808
    %v219 = vunpack.c.0.s8 %v218
    %v220 = vlaneseq
    %v221 = vshrl.u32 %v220, 7
    %v222 = vsub.s32 %v219, %v221
    %v223 = vrot.slane %v215, %v222
    %v225 = vunpack.c.l.s4 1983009808
    %v226 = vunpack.c.0.s8 %v225
    %v227 = vlaneseq
    %v228 = vshrl.u32 %v227, 7
    %v229 = vsub.s32 %v226, %v228
    %v230 = vrot.slane %v216, %v229
    %v231 = vcombine.low %v223, %v230
    %233 = vst [vmem:[#allocation7] sm:$0xff] %v231
    // Predicated region
    $region22: #{tpu_custom_call.1} parent=1 // pred_check
      _
    $region23: #{tpu_custom_call.1} parent=1 // pred_check_branch
      %235 = sbr.rel (0) target = $region25
    $region24: #{tpu_custom_call.1} parent=1 // pred_region
      %s237 = ssub.s32 128, 128
      %238 = vsyncadd [#allocation4], %s237
      %s240 = sshll.u32 [#allocation7], 4
      %s241 = int_to_ptr.vmem [resolvable:$true] %s240
      %243 = dma.vmem_to_hbm [thread:$0]  %s241, 128, %s3, [#allocation4]
    $region25: #{tpu_custom_call.1} parent=1 // pred_fallthru
      _
    // Predicated region
    $region26: #{tpu_custom_call.1} parent=1 // pred_check
      _
    $region27: #{tpu_custom_call.1} parent=1 // pred_check_branch
      %245 = sbr.rel (0) target = $region29
    $region28: #{tpu_custom_call.1} parent=1 // pred_region
      %246 = dma.done [#allocation4], 128
    $region29: #{tpu_custom_call.1} parent=1 // pred_fallthru
      _
    %247 = vsyncpa [#allocation3], 1
    %248 = vsyncpa [#allocation6], 1
    %249 = vsyncpa [#allocation4], 1

</llo_original>
